<compile_context>
chip_gen: v5e
topology: v5e:2x2
jax: 0.10.0
libtpu: 0.0.40
codegen_flags: <defaults>
</compile_context>

<pallas_src>
import math

import jax
import jax.numpy as jnp
from jax.experimental import pallas as pl
from jax.experimental.pallas import tpu as pltpu


def _round_up(x, m):
    return ((x + m - 1) // m) * m


# sublane packing per element size: f32 -> 8, bf16 -> 16, int8/fp8 -> 32
_SUBLANE_BY_ITEMSIZE = {4: 8, 2: 16, 1: 32}


def _vmem_policy():
    """Generation-aware (block_budget_bytes, vmem_limit_bytes)."""
    try:
        info = pltpu.get_tpu_info()
        cap = getattr(info, "vmem_capacity_bytes", 64 * 1024 * 1024)
    except Exception:
        cap = 64 * 1024 * 1024
    if cap >= 96 * 1024 * 1024:
        # v5e / v6e: 128 MiB physical VMEM -> generous working set.
        working_set = 40 * 1024 * 1024
        limit = 64 * 1024 * 1024
    else:
        # v7x: 64 MiB per TensorCore -> clamp; spend headroom on block size,
        # not deeper buffering (mem-bound, 2 buffers are enough).
        working_set = 24 * 1024 * 1024
        limit = 48 * 1024 * 1024
    # x + out tiles, each double-buffered -> 4 block-sized buffers in flight.
    return working_set // 4, limit


def _fold_factor(n, d):
    """Lane-folding factor f: view (n, d) as (n//f, f*d) with f*d lane-dense."""
    if d % 128 == 0:
        return 1
    lcm = (d * 128) // math.gcd(d, 128)
    if lcm > 2048:
        return 1
    f = lcm // d
    if n % f != 0:
        return 1
    return f


def _choose_tiles(n, d, itemsize, block_budget):
    sublane = _SUBLANE_BY_ITEMSIZE.get(itemsize, 8)
    d_lane = _round_up(d, 128)

    # Feature tile: prefer the full (lane-rounded) width if a healthy row
    # count still fits inside the per-block byte budget; otherwise back off to
    # the largest 128-multiple that keeps ~512 rows per block.
    min_rows = max(sublane, min(_round_up(n, sublane), 512))
    if d_lane * itemsize * min_rows <= block_budget:
        tile_d = d_lane
    else:
        tile_d = (block_budget // (min_rows * itemsize)) // 128 * 128
        tile_d = min(max(128, tile_d), d_lane)

    # Row tile: fill the per-block byte budget, sublane-aligned, capped by n.
    tile_n = (block_budget // (tile_d * itemsize)) // sublane * sublane
    tile_n = max(sublane, min(tile_n, _round_up(n, sublane)))

    # Guarantee >=2 blocks when the batch is splittable so both v7x
    # TensorCores get work (negligible cost on single-TC chips).
    if pl.cdiv(n, tile_n) == 1 and pl.cdiv(d, tile_d) == 1 and n > sublane:
        tile_n = max(sublane, _round_up(pl.cdiv(n, 2), sublane))

    return tile_n, tile_d


def _full_batch_norm_kernel(x_ref, scale_ref, bias_ref, o_ref):
    # x_ref: (tile_n, tile_d); scale_ref/bias_ref: (1, tile_d) f32.
    x = x_ref[...].astype(jnp.float32)
    o_ref[...] = (x * scale_ref[...] + bias_ref[...]).astype(o_ref.dtype)


def full_batch_norm(x, mean, var):
    """Pallas equivalent of FullBatchNorm.forward for x[..., D]."""
    orig_shape = x.shape
    d = orig_shape[-1]
    x2 = x.reshape(-1, d)
    n = x2.shape[0]
    itemsize = jnp.dtype(x2.dtype).itemsize

    # Parameter fold (f32, O(D) once): (x - mean) * inv_std == x*scale + bias
    inv_std = 1.0 / jnp.sqrt(var.astype(jnp.float32) + 1e-5)
    scale_row = inv_std
    bias_row = -mean.astype(jnp.float32) * inv_std

    # Small-D lane folding: view (n, d) as (n/f, f*d) (free, row-major reshape)
    # and tile the param rows, so the lane dim is dense.
    f = _fold_factor(n, d)
    n_eff, d_eff = n // f, d * f
    if f > 1:
        x2 = x2.reshape(n_eff, d_eff)
        scale_row = jnp.tile(scale_row, (f,))
        bias_row = jnp.tile(bias_row, (f,))

    block_budget, vmem_limit = _vmem_policy()
    tile_n, tile_d = _choose_tiles(n_eff, d_eff, itemsize, block_budget)
    grid = (pl.cdiv(n_eff, tile_n), pl.cdiv(d_eff, tile_d))

    # Params are tiny (O(D)); build them pre-padded to a tile_d multiple so
    # param blocks are never ragged (x itself is NOT padded).
    d_grid = grid[1] * tile_d
    scale_p = jnp.zeros((1, d_grid), jnp.float32).at[0, :d_eff].set(scale_row)
    bias_p = jnp.zeros((1, d_grid), jnp.float32).at[0, :d_eff].set(bias_row)

    out = pl.pallas_call(
        _full_batch_norm_kernel,
        out_shape=jax.ShapeDtypeStruct((n_eff, d_eff), x.dtype),
        grid_spec=pltpu.PrefetchScalarGridSpec(
            num_scalar_prefetch=0,
            grid=grid,
            in_specs=[
                pl.BlockSpec((tile_n, tile_d), lambda i, j: (i, j)),  # x tile
                pl.BlockSpec((1, tile_d), lambda i, j: (0, j)),       # scale
                pl.BlockSpec((1, tile_d), lambda i, j: (0, j)),       # bias
            ],
            out_specs=pl.BlockSpec((tile_n, tile_d), lambda i, j: (i, j)),
        ),
        compiler_params=pltpu.CompilerParams(
            dimension_semantics=("parallel", "parallel"),
            vmem_limit_bytes=vmem_limit,
        ),
    )(x2, scale_p, bias_p)

    return out.reshape(orig_shape)


if __name__ == "__main__":
    key = jax.random.PRNGKey(0)
    k_x, k_m, k_v, k_x2, k_m2, k_v2 = jax.random.split(key, 6)

    # Case 1: batch=8, hidden=32 (hits the lane-folding path: 32 -> 128).
    N, D = 8, 32
    x = jax.random.normal(k_x, (N, D), dtype=jnp.float32)
    mean = jax.random.normal(k_m, (D,), dtype=jnp.float32)
    var = jax.random.uniform(k_v, (D,), dtype=jnp.float32, minval=0.1, maxval=2.0)

    out = jax.block_until_ready(full_batch_norm(x, mean, var))
    ref = (x - mean[None, :]) * (1.0 / jnp.sqrt(var + 1e-5))[None, :]
    assert jnp.allclose(out, ref, atol=1e-5, rtol=1e-5), "mismatch vs reference (case 1)"

    # Case 2: ragged shape (hits the cdiv / partial-tail-block path, no padding).
    B2, S2, D2 = 3, 5, 40
    x_r = jax.random.normal(k_x2, (B2, S2, D2), dtype=jnp.float32)
    mean_r = jax.random.normal(k_m2, (D2,), dtype=jnp.float32)
    var_r = jax.random.uniform(k_v2, (D2,), dtype=jnp.float32, minval=0.1, maxval=2.0)

    out_r = jax.block_until_ready(full_batch_norm(x_r, mean_r, var_r))
    ref_r = (x_r - mean_r) * (1.0 / jnp.sqrt(var_r + 1e-5))
    assert jnp.allclose(out_r, ref_r, atol=1e-5, rtol=1e-5), "mismatch vs reference (case 2)"

    print("KERNEL_OK")
</pallas_src>

<mosaic_0001>
module attributes {stable_mosaic.version = 11 : i64} {
  func.func @_full_batch_norm_kernel(%arg0: i32, %arg1: i32, %arg2: memref<8x128xf32, #tpu.memory_space<vmem>>, %arg3: memref<1x128xf32, #tpu.memory_space<vmem>>, %arg4: memref<1x128xf32, #tpu.memory_space<vmem>>, %arg5: memref<8x128xf32, #tpu.memory_space<vmem>>) attributes {dimension_semantics = [#tpu.dimension_semantics<parallel>, #tpu.dimension_semantics<parallel>], iteration_bounds = array<i64: 1, 1>, scalar_prefetch = 0 : i64, scratch_operands = 0 : i64, tpu.core_type = #tpu.core_type<tc>, window_params = [{transform_indices = @transform_0, window_bounds = array<i64: 8, 128>}, {transform_indices = @transform_1, window_bounds = array<i64: 1, 128>}, {transform_indices = @transform_2, window_bounds = array<i64: 1, 128>}, {transform_indices = @transform_3, window_bounds = array<i64: 8, 128>}]} {
    %c0 = arith.constant 0 : index
    %c0_0 = arith.constant 0 : index
    %0 = vector.load %arg2[%c0, %c0_0] : memref<8x128xf32, #tpu.memory_space<vmem>>, vector<8x128xf32>
    %c0_1 = arith.constant 0 : index
    %c0_2 = arith.constant 0 : index
    %1 = vector.load %arg3[%c0_1, %c0_2] : memref<1x128xf32, #tpu.memory_space<vmem>>, vector<1x128xf32>
    %2 = vector.broadcast %1 : vector<1x128xf32> to vector<8x128xf32>
    %3 = arith.mulf %0, %2 : vector<8x128xf32>
    %c0_3 = arith.constant 0 : index
    %c0_4 = arith.constant 0 : index
    %4 = vector.load %arg4[%c0_3, %c0_4] : memref<1x128xf32, #tpu.memory_space<vmem>>, vector<1x128xf32>
    %5 = vector.broadcast %4 : vector<1x128xf32> to vector<8x128xf32>
    %6 = arith.addf %3, %5 : vector<8x128xf32>
    %c0_5 = arith.constant 0 : index
    %c0_6 = arith.constant 0 : index
    %7 = vector.load %arg5[%c0_5, %c0_6] : memref<8x128xf32, #tpu.memory_space<vmem>>, vector<8x128xf32>
    tpu.vector_store %arg5[%c0_5, %c0_6], %6 {strides = array<i32>} : memref<8x128xf32, #tpu.memory_space<vmem>>, vector<8x128xf32>,
    return
  }
  func.func @transform_0(%arg0: i32, %arg1: i32) -> (i32, i32) {
    %c0_i32 = arith.constant 0 : i32
    return %arg0, %arg1 : i32, i32
  }
  func.func @transform_1(%arg0: i32, %arg1: i32) -> (i32, i32) {
    %c0_i32 = arith.constant 0 : i32
    %c0_i32_0 = arith.constant 0 : i32
    return %c0_i32, %arg1 : i32, i32
  }
  func.func @transform_2(%arg0: i32, %arg1: i32) -> (i32, i32) {
    %c0_i32 = arith.constant 0 : i32
    %c0_i32_0 = arith.constant 0 : i32
    return %c0_i32, %arg1 : i32, i32
  }
  func.func @transform_3(%arg0: i32, %arg1: i32) -> (i32, i32) {
    %c0_i32 = arith.constant 0 : i32
    return %arg0, %arg1 : i32, i32
  }
}

</mosaic_0001>

<llo_original>
// kernel: tpu_custom_call.1
$region0: #{tpu_custom_call.1}
  #allocation0 [shape = 'u32[]', space=smem, size = 0x4, offset = 0x4, fixed_abs, tag = 'smem constant byte address 0x4 - core index']
  #allocation1 [shape = 'u32[72,128]{1,0:T(1,128)}', space=vmem, size = 0x9000, scoped, tag = 'internal scratch']
  %s0 = inlined_call_operand.hbm [shape: f32[2,128], index: 0, kind: input, shape index: {}]
  %s1 = inlined_call_operand.hbm [shape: f32[1,128], index: 1, kind: input, shape index: {}]
  %s2 = inlined_call_operand.vmem [shape: f32[1,128], index: 2, kind: input, shape index: {}]
  %s3 = inlined_call_operand.hbm [shape: f32[2,128], index: 3, kind: output, shape index: {}]
  %s4 = sld [smem:[#allocation0]]
  $region30: #{tpu_custom_call.1} parent=0
    _
  %s6 = ssub.s32 1, %s4
  %s7 = scalar_select 0, %s6, %s4
  $region1: #{tpu_custom_call.1} parent=0
    #allocation2 [shape = 'u8[4096]{0}', space=vmem, size = 0x1000, scoped, tag = 'input window, operand 0, single buffered']
    #allocation3 [shape = 's32[1]{0}', space=sflag, size = 0x4, scoped, tag = 'scoped memory for tpu_custom_call.1']
    #allocation4 [shape = 's32[1]{0}', space=sflag, size = 0x4, scoped, tag = 'scoped memory for tpu_custom_call.1']
    #allocation5 [shape = 'u8[512]{0}', space=vmem, size = 0x400, scoped, tag = 'input window, operand 1, single buffered']
    #allocation6 [shape = 's32[1]{0}', space=sflag, size = 0x4, scoped, tag = 'scoped memory for tpu_custom_call.1']
    #allocation7 [shape = 'u8[4096]{0}', space=vmem, size = 0x1000, scoped, tag = 'output window, operand 0, single buffered']
    %8 = vsyncpa [#allocation3], 0
    %9 = vsyncpa [#allocation6], 0
    %10 = vsyncpa [#allocation4], 0
    // Predicated region
    $region2: #{tpu_custom_call.1} parent=1 // pred_check
      _
    $region3: #{tpu_custom_call.1} parent=1 // pred_check_branch
      %12 = sbr.rel (0) target = $region5
    $region4: #{tpu_custom_call.1} parent=1 // pred_region
      %14 = vsyncadd [#allocation3], 96
      %s15 = sshll.u32 %s0, 4
      %s16 = int_to_ptr.hbm [resolvable:$true] %s15
      %s17 = sshll.u32 [#allocation2], 4
      %s18 = int_to_ptr.vmem [resolvable:$true] %s17
      %23 = dma.hbm_to_vmem [thread:$0]  %s16, 32, %s18, [#allocation3], 32, 32, 2
    $region5: #{tpu_custom_call.1} parent=1 // pred_fallthru
      _
    // Predicated region
    $region6: #{tpu_custom_call.1} parent=1 // pred_check
      _
    $region7: #{tpu_custom_call.1} parent=1 // pred_check_branch
      %25 = sbr.rel (0) target = $region9
    $region8: #{tpu_custom_call.1} parent=1 // pred_region
      %27 = vsyncadd [#allocation6], 0
      %s29 = sshll.u32 %s1, 4
      %s30 = int_to_ptr.hbm [resolvable:$true] %s29
      %s31 = sshll.u32 [#allocation5], 4
      %s32 = int_to_ptr.vmem [resolvable:$true] %s31
      %34 = dma.hbm_to_vmem [thread:$0]  %s30, 16, %s32, [#allocation6]
    $region9: #{tpu_custom_call.1} parent=1 // pred_fallthru
      _
    // Predicated region
    $region10: #{tpu_custom_call.1} parent=1 // pred_check
      _
    $region11: #{tpu_custom_call.1} parent=1 // pred_check_branch
      %36 = sbr.rel (0) target = $region13
    $region12: #{tpu_custom_call.1} parent=1 // pred_region
      _
    $region13: #{tpu_custom_call.1} parent=1 // pred_fallthru
      _
    // Predicated region
    $region14: #{tpu_custom_call.1} parent=1 // pred_check
      _
    $region15: #{tpu_custom_call.1} parent=1 // pred_check_branch
      %38 = sbr.rel (0) target = $region17
    $region16: #{tpu_custom_call.1} parent=1 // pred_region
      %40 = dma.done [#allocation3], 128
    $region17: #{tpu_custom_call.1} parent=1 // pred_fallthru
      _
    // Predicated region
    $region18: #{tpu_custom_call.1} parent=1 // pred_check
      _
    $region19: #{tpu_custom_call.1} parent=1 // pred_check_branch
      %42 = sbr.rel (0) target = $region21
    $region20: #{tpu_custom_call.1} parent=1 // pred_region
      %44 = dma.done [#allocation6], 16
    $region21: #{tpu_custom_call.1} parent=1 // pred_fallthru
      _
    %v45 = vld [vmem:[#allocation2] sm:$0xff]
    %v46 = vld [vmem:[#allocation5] sm:$0x1]
    %v48 = vperm.slane %v46, 0
    %v50 = vmul.f32 %v45, %v48
    %v51 = vld [vmem:[%s2] sm:$0x1]
    %v53 = vperm.slane %v51, 0
    %v55 = vadd.f32 %v50, %v53
    %56 = vst [vmem:[#allocation7] sm:$0xff] %v55
    // Predicated region
    $region22: #{tpu_custom_call.1} parent=1 // pred_check
      _
    $region23: #{tpu_custom_call.1} parent=1 // pred_check_branch
      %58 = sbr.rel (0) target = $region25
    $region24: #{tpu_custom_call.1} parent=1 // pred_region
      %60 = vsyncadd [#allocation4], 96
      %s61 = sshll.u32 [#allocation7], 4
      %s62 = int_to_ptr.vmem [resolvable:$true] %s61
      %s63 = sshll.u32 %s3, 4
      %s64 = int_to_ptr.hbm [resolvable:$true] %s63
      %69 = dma.vmem_to_hbm [thread:$0]  %s62, 32, %s64, [#allocation4], 32, 32, 2
    $region25: #{tpu_custom_call.1} parent=1 // pred_fallthru
      _
    // Predicated region
    $region26: #{tpu_custom_call.1} parent=1 // pred_check
      _
    $region27: #{tpu_custom_call.1} parent=1 // pred_check_branch
      %71 = sbr.rel (0) target = $region29
    $region28: #{tpu_custom_call.1} parent=1 // pred_region
      %73 = dma.done [#allocation4], 128
    $region29: #{tpu_custom_call.1} parent=1 // pred_fallthru
      _
    %74 = vsyncpa [#allocation3], 1
    %75 = vsyncpa [#allocation6], 1
    %76 = vsyncpa [#allocation4], 1

</llo_original>
